<compile_context>
chip_gen: v6e
topology: v6e:2x2x1
jax: 0.10.0
libtpu: 0.0.40
codegen_flags: <defaults>
</compile_context>

<pallas_src>
import jax
import jax.numpy as jnp
from jax import lax
from jax.experimental import pallas as pl
from jax.experimental.pallas import tpu as pltpu

LATENT_DIM = 3
NUM_CLASSES = 10
EMB_DIM = 16
IMG_DIM = 28 * 28
HIDDEN_DIM = 128
HEAD_DIM = 2 * LATENT_DIM   # fused [mu | logvar]

TB_MAX = 1024               # batch-tile cap (rows)


def _round_up(x, m):
    return (x + m - 1) // m * m


def _choose_tb(B):
    """Batch tile: full batch if tiny, else a multiple of 8, capped at TB_MAX,
    and sized so the grid has >= 2 steps (engages both v7x TensorCores)."""
    if B <= 8:
        return B
    half = -(-B // 2)                      # ceil(B / 2)
    return min(TB_MAX, _round_up(half, 8))


def _encoder_kernel(
    img_ref,      # (TB, 784)  f32  image tile (cast to bf16 in-kernel)
    label_ref,    # (TB, 1)    i32  labels
    w_img_ref,    # (784, 128) f32  image half of fc_hidden weight (resident)
    t_ref,        # (10, 128)  f32  folded embedding+bias table (resident)
    w_head_ref,   # (128, 6)   f32  [w_mu | w_logvar] (resident)
    b_head_ref,   # (1, 6)     f32  [b_mu | b_logvar] (resident)
    out_ref,      # (TB, 6)    f32  [mu | logvar]
):
    # Dominant matmul: bf16 x bf16 on the MXU with f32 accumulation.
    img_bf16 = img_ref[...].astype(jnp.bfloat16)
    w_bf16 = w_img_ref[...].astype(jnp.bfloat16)
    h = jnp.dot(img_bf16, w_bf16, preferred_element_type=jnp.float32)

    # One-hot built in-kernel (compare against iota; no HBM one-hot pass).
    lbl = label_ref[...]                                           # (TB, 1) i32
    tb = lbl.shape[0]
    iota = lax.broadcasted_iota(jnp.int32, (tb, NUM_CLASSES), 1)   # (TB, 10)
    onehot = (iota == lbl).astype(jnp.float32)

    # onehot @ T  ==  relu(emb(label)) @ W_h_emb + b_h  (folded per class).
    h = h + jnp.dot(onehot, t_ref[...], preferred_element_type=jnp.float32)
    h = jnp.maximum(h, 0.0)

    # Fused mu/logvar head.
    out_ref[...] = (
        jnp.dot(h, w_head_ref[...], preferred_element_type=jnp.float32)
        + b_head_ref[...]
    )


def init_params(key):
    """Deterministic parameter init mirroring the nn.Linear shapes.

    Weights are stored as (in_features, out_features) = W_pytorch.T."""
    ks = jax.random.split(key, 8)
    scale = 0.05
    return {
        "w_emb": scale * jax.random.normal(ks[0], (NUM_CLASSES, EMB_DIM), jnp.float32),
        "b_emb": scale * jax.random.normal(ks[1], (1, EMB_DIM), jnp.float32),
        "w_h": scale * jax.random.normal(ks[2], (IMG_DIM + EMB_DIM, HIDDEN_DIM), jnp.float32),
        "b_h": scale * jax.random.normal(ks[3], (1, HIDDEN_DIM), jnp.float32),
        "w_mu": scale * jax.random.normal(ks[4], (HIDDEN_DIM, LATENT_DIM), jnp.float32),
        "b_mu": scale * jax.random.normal(ks[5], (1, LATENT_DIM), jnp.float32),
        "w_lv": scale * jax.random.normal(ks[6], (HIDDEN_DIM, LATENT_DIM), jnp.float32),
        "b_lv": scale * jax.random.normal(ks[7], (1, LATENT_DIM), jnp.float32),
    }


@jax.jit
def encoder_forward(image, label, params):
    """image: (B, 1, 28, 28) f32 (NCHW), label: (B,) int -> (mu, logvar)."""
    B = image.shape[0]
    img_flat = image.reshape(B, IMG_DIM).astype(jnp.float32)   # (B, 784), streamed as-is
    label2d = label.astype(jnp.int32).reshape(B, 1)            # (B, 1) tiny int stream

    # ---- fold the embedding path into a (10, 128) table (tiny, done in XLA) ----
    # relu(one_hot(l) @ W_emb + b_emb) == relu(W_emb[l] + b_emb)
    emb_table = jax.nn.relu(params["w_emb"] + params["b_emb"])      # (10, 16)
    w_h_img = params["w_h"][:IMG_DIM, :]                            # (784, 128)
    w_h_emb = params["w_h"][IMG_DIM:, :]                            # (16, 128)
    t_table = emb_table @ w_h_emb + params["b_h"]                   # (10, 128)

    # ---- fuse the mu / logvar heads ----
    w_head = jnp.concatenate([params["w_mu"], params["w_lv"]], axis=1)  # (128, 6)
    b_head = jnp.concatenate([params["b_mu"], params["b_lv"]], axis=1)  # (1, 6)

    # ---- batch tiling: no padding copy; ragged last tile handled by Pallas ----
    tb = _choose_tb(B)
    grid = (pl.cdiv(B, tb),)

    out = pl.pallas_call(
        _encoder_kernel,
        out_shape=jax.ShapeDtypeStruct((B, HEAD_DIM), jnp.float32),
        grid=grid,
        in_specs=[
            pl.BlockSpec((tb, IMG_DIM), lambda i: (i, 0)),              # image tile
            pl.BlockSpec((tb, 1), lambda i: (i, 0)),                    # labels
            pl.BlockSpec((IMG_DIM, HIDDEN_DIM), lambda i: (0, 0)),      # W_h_img (resident)
            pl.BlockSpec((NUM_CLASSES, HIDDEN_DIM), lambda i: (0, 0)),  # T table (resident)
            pl.BlockSpec((HIDDEN_DIM, HEAD_DIM), lambda i: (0, 0)),     # fused head W
            pl.BlockSpec((1, HEAD_DIM), lambda i: (0, 0)),              # fused head b
        ],
        out_specs=pl.BlockSpec((tb, HEAD_DIM), lambda i: (i, 0)),
        compiler_params=pltpu.CompilerParams(
            dimension_semantics=("parallel",),
        ),
    )(img_flat, label2d, w_h_img, t_table, w_head, b_head)

    mu = out[:, :LATENT_DIM]
    logvar = out[:, LATENT_DIM:]
    return mu, logvar


def _reference_forward(image, label, params):
    """Pure-JAX f32 reference (matches the PyTorch module)."""
    B = image.shape[0]
    img_flat = image.reshape(B, -1)
    onehot = jax.nn.one_hot(label, NUM_CLASSES, dtype=jnp.float32)
    emb = jax.nn.relu(onehot @ params["w_emb"] + params["b_emb"])
    concat = jnp.concatenate([img_flat, emb], axis=1)
    h = jax.nn.relu(concat @ params["w_h"] + params["b_h"])
    mu = h @ params["w_mu"] + params["b_mu"]
    logvar = h @ params["w_lv"] + params["b_lv"]
    return mu, logvar


if __name__ == "__main__":
    key = jax.random.PRNGKey(0)
    k_img, k_lbl, k_par = jax.random.split(key, 3)

    B = 8
    image = jax.random.normal(k_img, (B, 1, 28, 28), jnp.float32)   # NCHW like PyTorch
    label = jax.random.randint(k_lbl, (B,), 0, NUM_CLASSES, jnp.int32)
    params = init_params(k_par)

    mu, logvar = encoder_forward(image, label, params)
    jax.block_until_ready((mu, logvar))

    mu_ref, logvar_ref = _reference_forward(image, label, params)
    # bf16 image/weight matmul (f32 accumulation) -> slightly looser tolerance
    assert jnp.allclose(mu, mu_ref, atol=2e-2, rtol=2e-2)
    assert jnp.allclose(logvar, logvar_ref, atol=2e-2, rtol=2e-2)
    assert mu.shape == (B, LATENT_DIM) and logvar.shape == (B, LATENT_DIM)

    print("KERNEL_OK")
</pallas_src>

<mosaic_0001>
module attributes {stable_mosaic.version = 11 : i64} {
  func.func @_encoder_kernel(%arg0: i32, %arg1: memref<8x784xf32, #tpu.memory_space<vmem>>, %arg2: memref<8x1xi32, #tpu.memory_space<vmem>>, %arg3: memref<784x128xf32, #tpu.memory_space<vmem>>, %arg4: memref<10x128xf32, #tpu.memory_space<vmem>>, %arg5: memref<128x6xf32, #tpu.memory_space<vmem>>, %arg6: memref<1x6xf32, #tpu.memory_space<vmem>>, %arg7: memref<8x6xf32, #tpu.memory_space<vmem>>) attributes {dimension_semantics = [#tpu.dimension_semantics<parallel>], iteration_bounds = array<i64: 1>, scalar_prefetch = 0 : i64, scratch_operands = 0 : i64, tpu.core_type = #tpu.core_type<tc>, window_params = [{transform_indices = @transform_0, window_bounds = array<i64: 8, 784>}, {transform_indices = @transform_1, window_bounds = array<i64: 8, 1>}, {pipeline_mode = #tpu.pipeline_mode<synchronous>, transform_indices = @transform_2, window_bounds = array<i64: 784, 128>}, {pipeline_mode = #tpu.pipeline_mode<synchronous>, transform_indices = @transform_3, window_bounds = array<i64: 10, 128>}, {pipeline_mode = #tpu.pipeline_mode<synchronous>, transform_indices = @transform_4, window_bounds = array<i64: 128, 6>}, {pipeline_mode = #tpu.pipeline_mode<synchronous>, transform_indices = @transform_5, window_bounds = array<i64: 1, 6>}, {transform_indices = @transform_6, window_bounds = array<i64: 8, 6>}]} {
    %c0 = arith.constant 0 : index
    %c0_0 = arith.constant 0 : index
    %0 = vector.load %arg1[%c0, %c0_0] : memref<8x784xf32, #tpu.memory_space<vmem>>, vector<8x784xf32>
    %1 = arith.truncf %0 : vector<8x784xf32> to vector<8x784xbf16>
    %c0_1 = arith.constant 0 : index
    %c0_2 = arith.constant 0 : index
    %2 = vector.load %arg3[%c0_1, %c0_2] : memref<784x128xf32, #tpu.memory_space<vmem>>, vector<784x128xf32>
    %3 = arith.truncf %2 : vector<784x128xf32> to vector<784x128xbf16>
    %cst = arith.constant dense<0.000000e+00> : vector<8x128xf32>
    %4 = tpu.matmul %1, %3, %cst {dimension_numbers = #tpu.dot_dimension_numbers<[1], [0], [0], [1], [0, 0, 1, 1], [], []>} : vector<8x784xbf16>, vector<784x128xbf16>, vector<8x128xf32> -> vector<8x128xf32>
    %c0_3 = arith.constant 0 : index
    %c0_4 = arith.constant 0 : index
    %5 = vector.load %arg2[%c0_3, %c0_4] : memref<8x1xi32, #tpu.memory_space<vmem>>, vector<8x1xi32>
    %6 = tpu.iota {dimensions = array<i32: 1>} : vector<8x10xi32>
    %7 = vector.broadcast %5 : vector<8x1xi32> to vector<8x10xi32>
    %8 = arith.cmpi eq, %6, %7 : vector<8x10xi32>
    %9 = arith.extui %8 : vector<8x10xi1> to vector<8x10xi32>
    %10 = arith.sitofp %9 : vector<8x10xi32> to vector<8x10xf32>
    %c0_5 = arith.constant 0 : index
    %c0_6 = arith.constant 0 : index
    %11 = vector.load %arg4[%c0_5, %c0_6] : memref<10x128xf32, #tpu.memory_space<vmem>>, vector<10x128xf32>
    %cst_7 = arith.constant dense<0.000000e+00> : vector<8x128xf32>
    %12 = tpu.matmul %10, %11, %cst_7 {dimension_numbers = #tpu.dot_dimension_numbers<[1], [0], [0], [1], [0, 0, 1, 1], [], []>} : vector<8x10xf32>, vector<10x128xf32>, vector<8x128xf32> -> vector<8x128xf32>
    %13 = arith.addf %4, %12 : vector<8x128xf32>
    %cst_8 = arith.constant 0.000000e+00 : f32
    %14 = vector.broadcast %cst_8 : f32 to vector<8x128xf32>
    %15 = arith.maximumf %13, %14 : vector<8x128xf32>
    %c0_9 = arith.constant 0 : index
    %c0_10 = arith.constant 0 : index
    %16 = vector.load %arg5[%c0_9, %c0_10] : memref<128x6xf32, #tpu.memory_space<vmem>>, vector<128x6xf32>
    %cst_11 = arith.constant dense<0.000000e+00> : vector<8x6xf32>
    %17 = tpu.matmul %15, %16, %cst_11 {dimension_numbers = #tpu.dot_dimension_numbers<[1], [0], [0], [1], [0, 0, 1, 1], [], []>} : vector<8x128xf32>, vector<128x6xf32>, vector<8x6xf32> -> vector<8x6xf32>
    %c0_12 = arith.constant 0 : index
    %c0_13 = arith.constant 0 : index
    %18 = vector.load %arg6[%c0_12, %c0_13] : memref<1x6xf32, #tpu.memory_space<vmem>>, vector<1x6xf32>
    %19 = vector.broadcast %18 : vector<1x6xf32> to vector<8x6xf32>
    %20 = arith.addf %17, %19 : vector<8x6xf32>
    %c0_14 = arith.constant 0 : index
    %c0_15 = arith.constant 0 : index
    %21 = vector.load %arg7[%c0_14, %c0_15] : memref<8x6xf32, #tpu.memory_space<vmem>>, vector<8x6xf32>
    tpu.vector_store %arg7[%c0_14, %c0_15], %20 {strides = array<i32>} : memref<8x6xf32, #tpu.memory_space<vmem>>, vector<8x6xf32>,
    return
  }
  func.func @transform_0(%arg0: i32) -> (i32, i32) {
    %c0_i32 = arith.constant 0 : i32
    %c0_i32_0 = arith.constant 0 : i32
    return %arg0, %c0_i32 : i32, i32
  }
  func.func @transform_1(%arg0: i32) -> (i32, i32) {
    %c0_i32 = arith.constant 0 : i32
    %c0_i32_0 = arith.constant 0 : i32
    return %arg0, %c0_i32 : i32, i32
  }
  func.func @transform_2(%arg0: i32) -> (i32, i32) {
    %c0_i32 = arith.constant 0 : i32
    %c0_i32_0 = arith.constant 0 : i32
    %c0_i32_1 = arith.constant 0 : i32
    return %c0_i32, %c0_i32_0 : i32, i32
  }
  func.func @transform_3(%arg0: i32) -> (i32, i32) {
    %c0_i32 = arith.constant 0 : i32
    %c0_i32_0 = arith.constant 0 : i32
    %c0_i32_1 = arith.constant 0 : i32
    return %c0_i32, %c0_i32_0 : i32, i32
  }
  func.func @transform_4(%arg0: i32) -> (i32, i32) {
    %c0_i32 = arith.constant 0 : i32
    %c0_i32_0 = arith.constant 0 : i32
    %c0_i32_1 = arith.constant 0 : i32
    return %c0_i32, %c0_i32_0 : i32, i32
  }
  func.func @transform_5(%arg0: i32) -> (i32, i32) {
    %c0_i32 = arith.constant 0 : i32
    %c0_i32_0 = arith.constant 0 : i32
    %c0_i32_1 = arith.constant 0 : i32
    return %c0_i32, %c0_i32_0 : i32, i32
  }
  func.func @transform_6(%arg0: i32) -> (i32, i32) {
    %c0_i32 = arith.constant 0 : i32
    %c0_i32_0 = arith.constant 0 : i32
    return %arg0, %c0_i32 : i32, i32
  }
}

</mosaic_0001>

<llo_original>
// kernel: encoder_forward.1
$region0: #{encoder_forward.1}
  #allocation0 [shape = 'u32[]', space=smem, size = 0x4, offset = 0x4, fixed_abs, tag = 'smem constant byte address 0x4 - core index']
  #allocation1 [shape = 'u32[144,128]{1,0:T(1,128)}', space=vmem, size = 0x12000, scoped, tag = 'internal scratch']
  %s0 = inlined_call_operand.vmem [shape: f32[8,784], index: 0, kind: input, shape index: {}]
  %s1 = inlined_call_operand.vmem [shape: s32[8,1], index: 1, kind: input, shape index: {}]
  %s2 = inlined_call_operand.vmem [shape: f32[784,128], index: 2, kind: input, shape index: {}]
  %s3 = inlined_call_operand.vmem [shape: f32[10,128], index: 3, kind: input, shape index: {}]
  %s4 = inlined_call_operand.vmem [shape: f32[128,6], index: 4, kind: input, shape index: {}]
  %s5 = inlined_call_operand.vmem [shape: f32[1,6], index: 5, kind: input, shape index: {}]
  %s6 = inlined_call_operand.vmem [shape: f32[8,6], index: 6, kind: output, shape index: {}]
  %s7 = sld [smem:[#allocation0]]
  $region34: #{encoder_forward.1} parent=0
    _
  %s9 = ssub.s32 1, %s7
  %s10 = scalar_select 0, %s9, %s7
  // Predicated region
  $region2: #{encoder_forward.1} parent=0 // pred_check
    _
  $region3: #{encoder_forward.1} parent=0 // pred_check_branch
    %12 = sbr.rel (0) target = $region5
  $region4: #{encoder_forward.1} parent=0 // pred_region
    _
  $region5: #{encoder_forward.1} parent=0 // pred_fallthru
    _
  // Predicated region
  $region6: #{encoder_forward.1} parent=0 // pred_check
    _
  $region7: #{encoder_forward.1} parent=0 // pred_check_branch
    %14 = sbr.rel (0) target = $region9
  $region8: #{encoder_forward.1} parent=0 // pred_region
    _
  $region9: #{encoder_forward.1} parent=0 // pred_fallthru
    _
  // Predicated region
  $region10: #{encoder_forward.1} parent=0 // pred_check
    _
  $region11: #{encoder_forward.1} parent=0 // pred_check_branch
    %16 = sbr.rel (0) target = $region13
  $region12: #{encoder_forward.1} parent=0 // pred_region
    _
  $region13: #{encoder_forward.1} parent=0 // pred_fallthru
    _
  // Predicated region
  $region14: #{encoder_forward.1} parent=0 // pred_check
    _
  $region15: #{encoder_forward.1} parent=0 // pred_check_branch
    %18 = sbr.rel (0) target = $region17
  $region16: #{encoder_forward.1} parent=0 // pred_region
    _
  $region17: #{encoder_forward.1} parent=0 // pred_fallthru
    _
  // Predicated region
  $region18: #{encoder_forward.1} parent=0 // pred_check
    _
  $region19: #{encoder_forward.1} parent=0 // pred_check_branch
    %20 = sbr.rel (0) target = $region21
  $region20: #{encoder_forward.1} parent=0 // pred_region
    _
  $region21: #{encoder_forward.1} parent=0 // pred_fallthru
    _
  // Predicated region
  $region22: #{encoder_forward.1} parent=0 // pred_check
    _
  $region23: #{encoder_forward.1} parent=0 // pred_check_branch
    %22 = sbr.rel (0) target = $region25
  $region24: #{encoder_forward.1} parent=0 // pred_region
    _
  $region25: #{encoder_forward.1} parent=0 // pred_fallthru
    _
  %v24 = vld [vmem:[%s0] sm:$0xff]
  %v25 = vld [vmem:[%s0 + $0x8] sm:$0xff]
  %v26 = vld [vmem:[%s0 + $0x10] sm:$0xff]
  %v27 = vld [vmem:[%s0 + $0x18] sm:$0xff]
  %v28 = vld [vmem:[%s0 + $0x20] sm:$0xff]
  %v29 = vld [vmem:[%s0 + $0x28] sm:$0xff]
  %v30 = vld [vmem:[%s0 + $0x30] sm:$0xff]
  %v31 = vpack.c.bf16 %v24, %v24
  %v32 = vpack.c.bf16 %v25, %v25
  %v33 = vpack.c.bf16 %v26, %v26
  %v34 = vpack.c.bf16 %v27, %v27
  %v35 = vpack.c.bf16 %v28, %v28
  %v36 = vpack.c.bf16 %v29, %v29
  %v37 = vpack.c.bf16 %v30, %v30
  %v38 = vld [vmem:[%s2] sm:$0xff]
  %v39 = vld [vmem:[%s2 + $0x8] sm:$0xff]
  %v40 = vld [vmem:[%s2 + $0x10] sm:$0xff]
  %v41 = vld [vmem:[%s2 + $0x18] sm:$0xff]
  %v42 = vld [vmem:[%s2 + $0x20] sm:$0xff]
  %v43 = vld [vmem:[%s2 + $0x28] sm:$0xff]
  %v44 = vld [vmem:[%s2 + $0x30] sm:$0xff]
  %v45 = vld [vmem:[%s2 + $0x38] sm:$0xff]
  %v46 = vld [vmem:[%s2 + $0x40] sm:$0xff]
  %v47 = vld [vmem:[%s2 + $0x48] sm:$0xff]
  %v48 = vld [vmem:[%s2 + $0x50] sm:$0xff]
  %v49 = vld [vmem:[%s2 + $0x58] sm:$0xff]
  %v50 = vld [vmem:[%s2 + $0x60] sm:$0xff]
  %v51 = vld [vmem:[%s2 + $0x68] sm:$0xff]
  %v52 = vld [vmem:[%s2 + $0x70] sm:$0xff]
  %v53 = vld [vmem:[%s2 + $0x78] sm:$0xff]
  %v54 = vld [vmem:[%s2 + $0x80] sm:$0xff]
  %v55 = vld [vmem:[%s2 + $0x88] sm:$0xff]
  %v56 = vld [vmem:[%s2 + $0x90] sm:$0xff]
  %v57 = vld [vmem:[%s2 + $0x98] sm:$0xff]
  %v58 = vld [vmem:[%s2 + $0xa0] sm:$0xff]
  %v59 = vld [vmem:[%s2 + $0xa8] sm:$0xff]
  %v60 = vld [vmem:[%s2 + $0xb0] sm:$0xff]
  %v61 = vld [vmem:[%s2 + $0xb8] sm:$0xff]
  %v62 = vld [vmem:[%s2 + $0xc0] sm:$0xff]
  %v63 = vld [vmem:[%s2 + $0xc8] sm:$0xff]
  %v64 = vld [vmem:[%s2 + $0xd0] sm:$0xff]
  %v65 = vld [vmem:[%s2 + $0xd8] sm:$0xff]
  %v66 = vld [vmem:[%s2 + $0xe0] sm:$0xff]
  %v67 = vld [vmem:[%s2 + $0xe8] sm:$0xff]
  %v68 = vld [vmem:[%s2 + $0xf0] sm:$0xff]
  %v69 = vld [vmem:[%s2 + $0xf8] sm:$0xff]
  %v70 = vld [vmem:[%s2 + $0x100] sm:$0xff]
  %v71 = vld [vmem:[%s2 + $0x108] sm:$0xff]
  %v72 = vld [vmem:[%s2 + $0x110] sm:$0xff]
  %v73 = vld [vmem:[%s2 + $0x118] sm:$0xff]
  %v74 = vld [vmem:[%s2 + $0x120] sm:$0xff]
  %v75 = vld [vmem:[%s2 + $0x128] sm:$0xff]
  %v76 = vld [vmem:[%s2 + $0x130] sm:$0xff]
  %v77 = vld [vmem:[%s2 + $0x138] sm:$0xff]
  %v78 = vld [vmem:[%s2 + $0x140] sm:$0xff]
  %v79 = vld [vmem:[%s2 + $0x148] sm:$0xff]
  %v80 = vld [vmem:[%s2 + $0x150] sm:$0xff]
  %v81 = vld [vmem:[%s2 + $0x158] sm:$0xff]
  %v82 = vld [vmem:[%s2 + $0x160] sm:$0xff]
  %v83 = vld [vmem:[%s2 + $0x168] sm:$0xff]
  %v84 = vld [vmem:[%s2 + $0x170] sm:$0xff]
  %v85 = vld [vmem:[%s2 + $0x178] sm:$0xff]
  %v86 = vld [vmem:[%s2 + $0x180] sm:$0xff]
  %v87 = vld [vmem:[%s2 + $0x188] sm:$0xff]
  %v88 = vld [vmem:[%s2 + $0x190] sm:$0xff]
  %v89 = vld [vmem:[%s2 + $0x198] sm:$0xff]
  %v90 = vld [vmem:[%s2 + $0x1a0] sm:$0xff]
  %v91 = vld [vmem:[%s2 + $0x1a8] sm:$0xff]
  %v92 = vld [vmem:[%s2 + $0x1b0] sm:$0xff]
  %v93 = vld [vmem:[%s2 + $0x1b8] sm:$0xff]
  %v94 = vld [vmem:[%s2 + $0x1c0] sm:$0xff]
  %v95 = vld [vmem:[%s2 + $0x1c8] sm:$0xff]
  %v96 = vld [vmem:[%s2 + $0x1d0] sm:$0xff]
  %v97 = vld [vmem:[%s2 + $0x1d8] sm:$0xff]
  %v98 = vld [vmem:[%s2 + $0x1e0] sm:$0xff]
  %v99 = vld [vmem:[%s2 + $0x1e8] sm:$0xff]
  %v100 = vld [vmem:[%s2 + $0x1f0] sm:$0xff]
  %v101 = vld [vmem:[%s2 + $0x1f8] sm:$0xff]
  %v102 = vld [vmem:[%s2 + $0x200] sm:$0xff]
  %v103 = vld [vmem:[%s2 + $0x208] sm:$0xff]
  %v104 = vld [vmem:[%s2 + $0x210] sm:$0xff]
  %v105 = vld [vmem:[%s2 + $0x218] sm:$0xff]
  %v106 = vld [vmem:[%s2 + $0x220] sm:$0xff]
  %v107 = vld [vmem:[%s2 + $0x228] sm:$0xff]
  %v108 = vld [vmem:[%s2 + $0x230] sm:$0xff]
  %v109 = vld [vmem:[%s2 + $0x238] sm:$0xff]
  %v110 = vld [vmem:[%s2 + $0x240] sm:$0xff]
  %v111 = vld [vmem:[%s2 + $0x248] sm:$0xff]
  %v112 = vld [vmem:[%s2 + $0x250] sm:$0xff]
  %v113 = vld [vmem:[%s2 + $0x258] sm:$0xff]
  %v114 = vld [vmem:[%s2 + $0x260] sm:$0xff]
  %v115 = vld [vmem:[%s2 + $0x268] sm:$0xff]
  %v116 = vld [vmem:[%s2 + $0x270] sm:$0xff]
  %v117 = vld [vmem:[%s2 + $0x278] sm:$0xff]
  %v118 = vld [vmem:[%s2 + $0x280] sm:$0xff]
  %v119 = vld [vmem:[%s2 + $0x288] sm:$0xff]
  %v120 = vld [vmem:[%s2 + $0x290] sm:$0xff]
  %v121 = vld [vmem:[%s2 + $0x298] sm:$0xff]
  %v122 = vld [vmem:[%s2 + $0x2a0] sm:$0xff]
  %v123 = vld [vmem:[%s2 + $0x2a8] sm:$0xff]
  %v124 = vld [vmem:[%s2 + $0x2b0] sm:$0xff]
  %v125 = vld [vmem:[%s2 + $0x2b8] sm:$0xff]
  %v126 = vld [vmem:[%s2 + $0x2c0] sm:$0xff]
  %v127 = vld [vmem:[%s2 + $0x2c8] sm:$0xff]
  %v128 = vld [vmem:[%s2 + $0x2d0] sm:$0xff]
  %v129 = vld [vmem:[%s2 + $0x2d8] sm:$0xff]
  %v130 = vld [vmem:[%s2 + $0x2e0] sm:$0xff]
  %v131 = vld [vmem:[%s2 + $0x2e8] sm:$0xff]
  %v132 = vld [vmem:[%s2 + $0x2f0] sm:$0xff]
  %v133 = vld [vmem:[%s2 + $0x2f8] sm:$0xff]
  %v134 = vld [vmem:[%s2 + $0x300] sm:$0xff]
  %v135 = vld [vmem:[%s2 + $0x308] sm:$0xff]
  %v136 = vpack.c.bf16 %v39, %v38
  %v137 = vpack.c.bf16 %v41, %v40
  %v138 = vpack.c.bf16 %v43, %v42
  %v139 = vpack.c.bf16 %v45, %v44
  %v140 = vpack.c.bf16 %v47, %v46
  %v141 = vpack.c.bf16 %v49, %v48
  %v142 = vpack.c.bf16 %v51, %v50
  %v143 = vpack.c.bf16 %v53, %v52
  %v144 = vpack.c.bf16 %v55, %v54
  %v145 = vpack.c.bf16 %v57, %v56
  %v146 = vpack.c.bf16 %v59, %v58
  %v147 = vpack.c.bf16 %v61, %v60
  %v148 = vpack.c.bf16 %v63, %v62
  %v149 = vpack.c.bf16 %v65, %v64
  %v150 = vpack.c.bf16 %v67, %v66
  %v151 = vpack.c.bf16 %v69, %v68
  %v152 = vpack.c.bf16 %v71, %v70
  %v153 = vpack.c.bf16 %v73, %v72
  %v154 = vpack.c.bf16 %v75, %v74
  %v155 = vpack.c.bf16 %v77, %v76
  %v156 = vpack.c.bf16 %v79, %v78
  %v157 = vpack.c.bf16 %v81, %v80
  %v158 = vpack.c.bf16 %v83, %v82
  %v159 = vpack.c.bf16 %v85, %v84
  %v160 = vpack.c.bf16 %v87, %v86
  %v161 = vpack.c.bf16 %v89, %v88
  %v162 = vpack.c.bf16 %v91, %v90
  %v163 = vpack.c.bf16 %v93, %v92
  %v164 = vpack.c.bf16 %v95, %v94
  %v165 = vpack.c.bf16 %v97, %v96
  %v166 = vpack.c.bf16 %v99, %v98
  %v167 = vpack.c.bf16 %v101, %v100
  %v168 = vpack.c.bf16 %v103, %v102
  %v169 = vpack.c.bf16 %v105, %v104
  %v170 = vpack.c.bf16 %v107, %v106
  %v171 = vpack.c.bf16 %v109, %v108
  %v172 = vpack.c.bf16 %v111, %v110
  %v173 = vpack.c.bf16 %v113, %v112
  %v174 = vpack.c.bf16 %v115, %v114
  %v175 = vpack.c.bf16 %v117, %v116
  %v176 = vpack.c.bf16 %v119, %v118
  %v177 = vpack.c.bf16 %v121, %v120
  %v178 = vpack.c.bf16 %v123, %v122
  %v179 = vpack.c.bf16 %v125, %v124
  %v180 = vpack.c.bf16 %v127, %v126
  %v181 = vpack.c.bf16 %v129, %v128
  %v182 = vpack.c.bf16 %v131, %v130
  %v183 = vpack.c.bf16 %v133, %v132
  %v184 = vpack.c.bf16 %v135, %v134
  %v185 = vld [vmem:[%s1] sm:$0xff]
  %v186 = vlaneseq
  %v187 = vand.u32 %v186, 127
  %188 = vset.pattern.permute.xlu0 0
  %189 = vperm.xlu0 %188, %v185
  %v190 = vpop.permute.xlu0 %189
  %vm191 = vcmp.eq.s32.totalorder %v187, %v190
  %v192 = vsel %vm191, 1, 0
  %v193 = vcvt.s32.f32 %v192
  %v194 = vld [vmem:[%s3] sm:$0xff]
  %v195 = vld [vmem:[%s3 + $0x8] sm:$0x3]
  %vm196 = vcmask 80896
  %v198 = vsel %vm196, %v193, 0
  %vm200 = vcmask 1041408
  %v202 = vsel %vm200, %v195, 0
  %204 = vmatprep.subr.mxu0 0.0
  %205 = vmatpush1.msra.mxu0 0.0
  %206 = vmatprep.subr.mxu0 0.0
  %207 = vmatpush1.msra.mxu0 0.0
  %208 = vmatprep.subr.mxu0 0.0
  %209 = vmatpush1.msra.mxu0 0.0
  %210 = vmatprep.subr.mxu0 0.0
  %211 = vmatpush1.msra.mxu0 0.0
  %212 = vmatprep.subr.mxu0 0.0
  %213 = vmatpush1.msra.mxu0 0.0
  %214 = vmatprep.subr.mxu0 0.0
  %215 = vmatpush1.msra.mxu0 0.0
  %216 = vmatprep.subr.mxu0 0.0
  %217 = vmatpush1.msra.mxu0 0.0
  %218 = vmatprep.subr.mxu0 0.0
  %219 = vmatpush1.msra.mxu0 0.0
  %220 = vmatprep.subr.mxu0 0.0
  %221 = vmatpush1.msra.mxu0 0.0
  %222 = vmatprep.subr.mxu0 0.0
  %223 = vmatpush1.msra.mxu0 0.0
  %224 = vmatprep.subr.mxu0 0.0
  %225 = vmatpush1.msra.mxu0 0.0
  %226 = vmatprep.subr.mxu0 0.0
  %227 = vmatpush1.msra.mxu0 0.0
  %228 = vmatprep.subr.mxu0 0.0
  %229 = vmatpush1.msra.mxu0 0.0
  %230 = vmatprep.subr.mxu0 0.0
  %231 = vmatpush1.msra.mxu0 0.0
  %232 = vmatprep.subr.mxu0 0.0
  %233 = vmatpush1.msra.mxu0 %v202
  %234 = vmatprep.subr.mxu0 0.0
  %235 = vmatpush1.msra.mxu0 %v194
  %236 = vmatprep.subr.mxu0 0.0
  %237 = vmatpush2.msra.mxu0 0.0
  %238 = vmatprep.subr.mxu0 0.0
  %239 = vmatpush2.msra.mxu0 0.0
  %240 = vmatprep.subr.mxu0 0.0
  %241 = vmatpush2.msra.mxu0 0.0
  %242 = vmatprep.subr.mxu0 0.0
  %243 = vmatpush2.msra.mxu0 0.0
  %244 = vmatprep.subr.mxu0 0.0
  %245 = vmatpush2.msra.mxu0 0.0
  %246 = vmatprep.subr.mxu0 0.0
  %247 = vmatpush2.msra.mxu0 0.0
  %248 = vmatprep.subr.mxu0 0.0
  %249 = vmatpush2.msra.mxu0 0.0
  %250 = vmatprep.subr.mxu0 0.0
  %251 = vmatpush2.msra.mxu0 0.0
  %252 = vmatprep.subr.mxu0 0.0
  %253 = vmatpush2.msra.mxu0 0.0
  %254 = vmatprep.subr.mxu0 0.0
  %255 = vmatpush2.msra.mxu0 0.0
  %256 = vmatprep.subr.mxu0 0.0
  %257 = vmatpush2.msra.mxu0 0.0
  %258 = vmatprep.subr.mxu0 0.0
  %259 = vmatpush2.msra.mxu0 0.0
  %260 = vmatprep.subr.mxu0 0.0
  %261 = vmatpush2.msra.mxu0 0.0
  %262 = vmatprep.subr.mxu0 0.0
  %263 = vmatpush2.msra.mxu0 0.0
  %264 = vmatprep.subr.mxu0 0.0
  %265 = vmatpush2.msra.mxu0 0.0
  %266 = vmatprep.subr.mxu0 0.0
  %267 = vmatpush2.msra.mxu0 0.0
  %268 = vmatprep.mubr.f32.mxu0 0.0
  %269 = vmatmul.mubr.f32.gmra.mxu0 %v198
  %v270 = vpop.f32.mrf.mxu0
  %v271 = vadd.f32 0.0, %v270
  %v272 = vpop.f32.mrf.mxu0
  %273 = vdwg.mxu0
  %vm274 = vcmask 130048
  %v276 = vsel %vm274, %v37, 0
  %278 = vmatprep.subr.bf16.mxu0 0
  %279 = vmatpush1.bf16.msra.mxu0 %v143
  %280 = vmatprep.subr.bf16.mxu0 0
  %281 = vmatpush1.bf16.msra.mxu0 %v142
  %282 = vmatprep.subr.bf16.mxu0 0
  %283 = vmatpush1.bf16.msra.mxu0 %v141
  %284 = vmatprep.subr.bf16.mxu0 0
  %285 = vmatpush1.bf16.msra.mxu0 %v140
  %286 = vmatprep.subr.bf16.mxu0 0
  %287 = vmatpush1.bf16.msra.mxu0 %v139
  %288 = vmatprep.subr.bf16.mxu0 0
  %289 = vmatpush1.bf16.msra.mxu0 %v138
  %290 = vmatprep.subr.bf16.mxu0 0
  %291 = vmatpush1.bf16.msra.mxu0 %v137
  %292 = vmatprep.subr.bf16.mxu0 0
  %293 = vmatpush1.bf16.msra.mxu0 %v136
  %294 = vmatprep.subr.bf16.mxu0 0
  %295 = vmatpush2.bf16.msra.mxu0 %v151
  %296 = vmatprep.subr.bf16.mxu0 0
  %297 = vmatpush2.bf16.msra.mxu0 %v150
  %298 = vmatprep.subr.bf16.mxu0 0
  %299 = vmatpush2.bf16.msra.mxu0 %v149
  %300 = vmatprep.subr.bf16.mxu0 0
  %301 = vmatpush2.bf16.msra.mxu0 %v148
  %302 = vmatprep.subr.bf16.mxu0 0
  %303 = vmatpush2.bf16.msra.mxu0 %v147
  %304 = vmatprep.subr.bf16.mxu0 0
  %305 = vmatpush2.bf16.msra.mxu0 %v146
  %306 = vmatprep.subr.bf16.mxu0 0
  %307 = vmatpush2.bf16.msra.mxu0 %v145
  %308 = vmatprep.subr.bf16.mxu0 0
  %309 = vmatpush2.bf16.msra.mxu0 %v144
  %310 = vmatprep.mubr.bf16.mxu0 %v32
  %311 = vmatmul.mubr.bf16.gmra.mxu0 %v31
  %v312 = vpop.f32.mrf.mxu0
  %v313 = vadd.f32 %v271, %v312
  %v314 = vpop.f32.mrf.mxu0
  %v315 = vpop.f32.mrf.mxu0
  %v316 = vpop.f32.mrf.mxu0
  %317 = vdwg.mxu0
  %318 = vmatprep.subr.bf16.mxu0 0
  %319 = vmatpush1.bf16.msra.mxu0 %v159
  %320 = vmatprep.subr.bf16.mxu0 0
  %321 = vmatpush1.bf16.msra.mxu0 %v158
  %322 = vmatprep.subr.bf16.mxu0 0
  %323 = vmatpush1.bf16.msra.mxu0 %v157
  %324 = vmatprep.subr.bf16.mxu0 0
  %325 = vmatpush1.bf16.msra.mxu0 %v156
  %326 = vmatprep.subr.bf16.mxu0 0
  %327 = vmatpush1.bf16.msra.mxu0 %v155
  %328 = vmatprep.subr.bf16.mxu0 0
  %329 = vmatpush1.bf16.msra.mxu0 %v154
  %330 = vmatprep.subr.bf16.mxu0 0
  %331 = vmatpush1.bf16.msra.mxu0 %v153
  %332 = vmatprep.subr.bf16.mxu0 0
  %333 = vmatpush1.bf16.msra.mxu0 %v152
  %334 = vmatprep.subr.bf16.mxu0 0
  %335 = vmatpush2.bf16.msra.mxu0 %v167
  %336 = vmatprep.subr.bf16.mxu0 0
  %337 = vmatpush2.bf16.msra.mxu0 %v166
  %338 = vmatprep.subr.bf16.mxu0 0
  %339 = vmatpush2.bf16.msra.mxu0 %v165
  %340 = vmatprep.subr.bf16.mxu0 0
  %341 = vmatpush2.bf16.msra.mxu0 %v164
  %342 = vmatprep.subr.bf16.mxu0 0
  %343 = vmatpush2.bf16.msra.mxu0 %v163
  %344 = vmatprep.subr.bf16.mxu0 0
  %345 = vmatpush2.bf16.msra.mxu0 %v162
  %346 = vmatprep.subr.bf16.mxu0 0
  %347 = vmatpush2.bf16.msra.mxu0 %v161
  %348 = vmatprep.subr.bf16.mxu0 0
  %349 = vmatpush2.bf16.msra.mxu0 %v160
  %350 = vmatprep.mubr.bf16.mxu0 %v34
  %351 = vmatmul.mubr.bf16.gmra.mxu0 %v33
  %v352 = vpop.f32.mrf.mxu0
  %v353 = vadd.f32 %v313, %v352
  %v354 = vpop.f32.mrf.mxu0
  %v355 = vpop.f32.mrf.mxu0
  %v356 = vpop.f32.mrf.mxu0
  %357 = vdwg.mxu0
  %358 = vmatprep.subr.bf16.mxu0 0
  %359 = vmatpush1.bf16.msra.mxu0 %v175
  %360 = vmatprep.subr.bf16.mxu0 0
  %361 = vmatpush1.bf16.msra.mxu0 %v174
  %362 = vmatprep.subr.bf16.mxu0 0
  %363 = vmatpush1.bf16.msra.mxu0 %v173
  %364 = vmatprep.subr.bf16.mxu0 0
  %365 = vmatpush1.bf16.msra.mxu0 %v172
  %366 = vmatprep.subr.bf16.mxu0 0
  %367 = vmatpush1.bf16.msra.mxu0 %v171
  %368 = vmatprep.subr.bf16.mxu0 0
  %369 = vmatpush1.bf16.msra.mxu0 %v170
  %370 = vmatprep.subr.bf16.mxu0 0
  %371 = vmatpush1.bf16.msra.mxu0 %v169
  %372 = vmatprep.subr.bf16.mxu0 0
  %373 = vmatpush1.bf16.msra.mxu0 %v168
  %374 = vmatprep.subr.bf16.mxu0 0
  %375 = vmatpush2.bf16.msra.mxu0 %v183
  %376 = vmatprep.subr.bf16.mxu0 0
  %377 = vmatpush2.bf16.msra.mxu0 %v182
  %378 = vmatprep.subr.bf16.mxu0 0
  %379 = vmatpush2.bf16.msra.mxu0 %v181
  %380 = vmatprep.subr.bf16.mxu0 0
  %381 = vmatpush2.bf16.msra.mxu0 %v180
  %382 = vmatprep.subr.bf16.mxu0 0
  %383 = vmatpush2.bf16.msra.mxu0 %v179
  %384 = vmatprep.subr.bf16.mxu0 0
  %385 = vmatpush2.bf16.msra.mxu0 %v178
  %386 = vmatprep.subr.bf16.mxu0 0
  %387 = vmatpush2.bf16.msra.mxu0 %v177
  %388 = vmatprep.subr.bf16.mxu0 0
  %389 = vmatpush2.bf16.msra.mxu0 %v176
  %390 = vmatprep.mubr.bf16.mxu0 %v36
  %391 = vmatmul.mubr.bf16.gmra.mxu0 %v35
  %v392 = vpop.f32.mrf.mxu0
  %v393 = vadd.f32 %v353, %v392
  %v394 = vpop.f32.mrf.mxu0
  %v395 = vpop.f32.mrf.mxu0
  %v396 = vpop.f32.mrf.mxu0
  %397 = vdwg.mxu0
  %398 = vmatprep.subr.bf16.mxu0 0
  %399 = vmatpush1.bf16.msra.mxu0 0
  %400 = vmatprep.subr.bf16.mxu0 0
  %401 = vmatpush1.bf16.msra.mxu0 0
  %402 = vmatprep.subr.bf16.mxu0 0
  %403 = vmatpush1.bf16.msra.mxu0 0
  %404 = vmatprep.subr.bf16.mxu0 0
  %405 = vmatpush1.bf16.msra.mxu0 0
  %406 = vmatprep.subr.bf16.mxu0 0
  %407 = vmatpush1.bf16.msra.mxu0 0
  %408 = vmatprep.subr.bf16.mxu0 0
  %409 = vmatpush1.bf16.msra.mxu0 0
  %410 = vmatprep.subr.bf16.mxu0 0
  %411 = vmatpush1.bf16.msra.mxu0 0
  %412 = vmatprep.subr.bf16.mxu0 0
  %413 = vmatpush1.bf16.msra.mxu0 %v184
  %414 = vmatprep.subr.bf16.mxu0 0
  %415 = vmatpush2.bf16.msra.mxu0 0
  %416 = vmatprep.subr.bf16.mxu0 0
  %417 = vmatpush2.bf16.msra.mxu0 0
  %418 = vmatprep.subr.bf16.mxu0 0
  %419 = vmatpush2.bf16.msra.mxu0 0
  %420 = vmatprep.subr.bf16.mxu0 0
  %421 = vmatpush2.bf16.msra.mxu0 0
  %422 = vmatprep.subr.bf16.mxu0 0
  %423 = vmatpush2.bf16.msra.mxu0 0
  %424 = vmatprep.subr.bf16.mxu0 0
  %425 = vmatpush2.bf16.msra.mxu0 0
  %426 = vmatprep.subr.bf16.mxu0 0
  %427 = vmatpush2.bf16.msra.mxu0 0
  %428 = vmatprep.subr.bf16.mxu0 0
  %429 = vmatpush2.bf16.msra.mxu0 0
  %430 = vmatprep.mubr.bf16.mxu0 0
  %431 = vmatmul.mubr.bf16.gmra.mxu0 %v276
  %v432 = vpop.f32.mrf.mxu0
  %v433 = vadd.f32 %v393, %v432
  %v434 = vpop.f32.mrf.mxu0
  %v435 = vpop.f32.mrf.mxu0
  %v436 = vpop.f32.mrf.mxu0
  %437 = vdwg.mxu0
  %v438 = vmax.f32 %v433, 0.0
  %v439 = vld [vmem:[%s4] sm:$0xff]
  %v440 = vld [vmem:[%s4 + $0x8] sm:$0xff]
  %v441 = vld [vmem:[%s4 + $0x10] sm:$0xff]
  %v442 = vld [vmem:[%s4 + $0x18] sm:$0xff]
  %v443 = vld [vmem:[%s4 + $0x20] sm:$0xff]
  %v444 = vld [vmem:[%s4 + $0x28] sm:$0xff]
  %v445 = vld [vmem:[%s4 + $0x30] sm:$0xff]
  %v446 = vld [vmem:[%s4 + $0x38] sm:$0xff]
  %v447 = vld [vmem:[%s4 + $0x40] sm:$0xff]
  %v448 = vld [vmem:[%s4 + $0x48] sm:$0xff]
  %v449 = vld [vmem:[%s4 + $0x50] sm:$0xff]
  %v450 = vld [vmem:[%s4 + $0x58] sm:$0xff]
  %v451 = vld [vmem:[%s4 + $0x60] sm:$0xff]
  %v452 = vld [vmem:[%s4 + $0x68] sm:$0xff]
  %v453 = vld [vmem:[%s4 + $0x70] sm:$0xff]
  %v454 = vld [vmem:[%s4 + $0x78] sm:$0xff]
  %v455 = vld [vmem:[%s5] sm:$0x1]
  %v457 = vlaneseq
  %v458 = vshrl.u32 %v457, 7
  %v459 = vsub.s32 0, %v458
  %v460 = vrot.slane %v455, %v459
  %462 = vmatprep.subr.mxu0 0.0
  %463 = vmatpush1.msra.mxu0 %v454
  %464 = vmatprep.subr.mxu0 0.0
  %465 = vmatpush1.msra.mxu0 %v453
  %466 = vmatprep.subr.mxu0 0.0
  %467 = vmatpush1.msra.mxu0 %v452
  %468 = vmatprep.subr.mxu0 0.0
  %469 = vmatpush1.msra.mxu0 %v451
  %470 = vmatprep.subr.mxu0 0.0
  %471 = vmatpush1.msra.mxu0 %v450
  %472 = vmatprep.subr.mxu0 0.0
  %473 = vmatpush1.msra.mxu0 %v449
  %474 = vmatprep.subr.mxu0 0.0
  %475 = vmatpush1.msra.mxu0 %v448
  %476 = vmatprep.subr.mxu0 0.0
  %477 = vmatpush1.msra.mxu0 %v447
  %478 = vmatprep.subr.mxu0 0.0
  %479 = vmatpush1.msra.mxu0 %v446
  %480 = vmatprep.subr.mxu0 0.0
  %481 = vmatpush1.msra.mxu0 %v445
  %482 = vmatprep.subr.mxu0 0.0
  %483 = vmatpush1.msra.mxu0 %v444
  %484 = vmatprep.subr.mxu0 0.0
  %485 = vmatpush1.msra.mxu0 %v443
  %486 = vmatprep.subr.mxu0 0.0
  %487 = vmatpush1.msra.mxu0 %v442
  %488 = vmatprep.subr.mxu0 0.0
  %489 = vmatpush1.msra.mxu0 %v441
  %490 = vmatprep.subr.mxu0 0.0
  %491 = vmatpush1.msra.mxu0 %v440
  %492 = vmatprep.subr.mxu0 0.0
  %493 = vmatpush1.msra.mxu0 %v439
  %494 = vmatprep.subr.mxu0 0.0
  %495 = vmatpush2.msra.mxu0 0.0
  %496 = vmatprep.subr.mxu0 0.0
  %497 = vmatpush2.msra.mxu0 0.0
  %498 = vmatprep.subr.mxu0 0.0
  %499 = vmatpush2.msra.mxu0 0.0
  %500 = vmatprep.subr.mxu0 0.0
  %501 = vmatpush2.msra.mxu0 0.0
  %502 = vmatprep.subr.mxu0 0.0
  %503 = vmatpush2.msra.mxu0 0.0
  %504 = vmatprep.subr.mxu0 0.0
  %505 = vmatpush2.msra.mxu0 0.0
  %506 = vmatprep.subr.mxu0 0.0
  %507 = vmatpush2.msra.mxu0 0.0
  %508 = vmatprep.subr.mxu0 0.0
  %509 = vmatpush2.msra.mxu0 0.0
  %510 = vmatprep.subr.mxu0 0.0
  %511 = vmatpush2.msra.mxu0 0.0
  %512 = vmatprep.subr.mxu0 0.0
  %513 = vmatpush2.msra.mxu0 0.0
  %514 = vmatprep.subr.mxu0 0.0
  %515 = vmatpush2.msra.mxu0 0.0
  %516 = vmatprep.subr.mxu0 0.0
  %517 = vmatpush2.msra.mxu0 0.0
  %518 = vmatprep.subr.mxu0 0.0
  %519 = vmatpush2.msra.mxu0 0.0
  %520 = vmatprep.subr.mxu0 0.0
  %521 = vmatpush2.msra.mxu0 0.0
  %522 = vmatprep.subr.mxu0 0.0
  %523 = vmatpush2.msra.mxu0 0.0
  %524 = vmatprep.subr.mxu0 0.0
  %525 = vmatpush2.msra.mxu0 0.0
  %526 = vmatprep.mubr.f32.mxu0 0.0
  %527 = vmatmul.mubr.f32.gmra.mxu0 %v438
  %v528 = vpop.f32.mrf.mxu0
  %v529 = vadd.f32 %v460, %v528
  %v530 = vpop.f32.mrf.mxu0
  %531 = vdwg.mxu0
  %vm532 = vcmask 48128
  %533 = vst.msk [vmem:[%s6] sm:$0xff] %vm532, %v529
  // Predicated region
  $region26: #{encoder_forward.1} parent=0 // pred_check
    _
  $region27: #{encoder_forward.1} parent=0 // pred_check_branch
    %535 = sbr.rel (0) target = $region29
  $region28: #{encoder_forward.1} parent=0 // pred_region
    _
  $region29: #{encoder_forward.1} parent=0 // pred_fallthru
    _
  // Predicated region
  $region30: #{encoder_forward.1} parent=0 // pred_check
    _
  $region31: #{encoder_forward.1} parent=0 // pred_check_branch
    %537 = sbr.rel (0) target = $region33
  $region32: #{encoder_forward.1} parent=0 // pred_region
    _
  $region33: #{encoder_forward.1} parent=0 // pred_fallthru
    _

</llo_original>
